<compile_context>
chip_gen: v7x
topology: tpu7x:2x2x1
jax: 0.10.0
libtpu: 0.0.40
codegen_flags: <defaults>
</compile_context>

<pallas_src>
import math

import numpy as np
import jax
import jax.numpy as jnp
from jax import lax
from jax.experimental import pallas as pl
from jax.experimental.pallas import tpu as pltpu


def _round_up(n: int, m: int) -> int:
    return ((n + m - 1) // m) * m


def _vmem_budget_bytes() -> int:
    """Per-generation scoped-VMEM budget used for tile sizing."""
    try:
        cap = pltpu.get_tpu_info().vmem_capacity_bytes
    except Exception:
        cap = 64 * 1024 * 1024                # conservative: assume v7x (64 MiB/TC)
    if cap >= 96 * 1024 * 1024:               # v5e / v6e: 128 MiB physical VMEM
        return 80 * 1024 * 1024
    return 48 * 1024 * 1024                   # v7x: leave headroom below 64 MiB


def ortho_basis(n: int) -> jnp.ndarray:
    """Basis of n x n skew-symmetric matrices, shape (n*(n-1)/2, n, n).

    Only used by the __main__ reference check; the wrapper builds the
    skew-symmetric generator directly (O(F^2)) instead of this O(F^4) basis.
    """
    iu, ju = np.triu_indices(n, k=1)
    k = len(iu)
    B = np.zeros((k, n, n), dtype=np.float32)
    B[np.arange(k), iu, ju] = 1.0
    B[np.arange(k), ju, iu] = -1.0
    return jnp.asarray(B)


def ortho_linear_kernel(x_ref, q_ref, b_ref, o_ref, acc_ref):
    """One (tm, tn) output tile: y = x @ Q^T + bias, accumulated over K tiles."""
    k = pl.program_id(2)

    @pl.when(k == 0)
    def _():
        acc_ref[...] = jnp.zeros_like(acc_ref)

    # Contract x's feature dim with Q's LAST dim (x @ Q^T) — no wrapper-side
    # transpose of Q.  bf16 operands, f32 MXU accumulation.
    acc_ref[...] += lax.dot_general(
        x_ref[...], q_ref[...],
        dimension_numbers=(((1,), (1,)), ((), ())),
        preferred_element_type=jnp.float32,
    )

    @pl.when(k == pl.num_programs(2) - 1)
    def _():
        o_ref[...] = (acc_ref[...] + b_ref[...]).astype(o_ref.dtype)


def ortho_linear(x: jnp.ndarray, weight: jnp.ndarray, bias: jnp.ndarray,
                 *, tm: int = 512,
                 compute_dtype=jnp.bfloat16) -> jnp.ndarray:
    """Forward pass of OrthoLinear.

    x:      (batch, features)
    weight: (features*(features-1)/2,) rotation angles
    bias:   (features,)
    """
    batch, feats = x.shape
    out_dtype = x.dtype

    # ---- parameter setup (plain JAX glue, tiny F x F work) -----------------
    # Direct O(F^2) construction of the skew-symmetric generator, then
    # Q = expm(A) is orthogonal.
    iu, ju = np.triu_indices(feats, k=1)
    A = jnp.zeros((feats, feats), jnp.float32).at[iu, ju].set(
        weight.astype(jnp.float32))
    A = A - A.T
    Q = jax.scipy.linalg.expm(A)                       # (feats, feats)

    # ---- TPU-friendly layout: lane-dense feature dim ------------------------
    f_pad = _round_up(feats, 128)
    pad_f = f_pad - feats

    x_c = x.astype(compute_dtype)
    q_c = Q.astype(compute_dtype)
    b_c = bias.astype(jnp.float32)
    if pad_f:
        # Feature padding only; batch is handled by a ragged grid (no HBM copy
        # of x for batch, and none at all when feats % 128 == 0).
        x_c = jnp.pad(x_c, ((0, 0), (0, pad_f)))
        q_c = jnp.pad(q_c, ((0, pad_f), (0, pad_f)))
        b_c = jnp.pad(b_c, (0, pad_f))
    b_c = b_c.reshape(1, f_pad)

    # ---- tile selection ------------------------------------------------------
    budget = _vmem_budget_bytes()
    csz = jnp.dtype(compute_dtype).itemsize

    # Feature tiles (tn = tk): largest multiple of 128 dividing f_pad whose
    # double-buffered Q tile uses at most ~1/3 of the budget, so the batch
    # tile can stay large (prefers 256-aligned tiles automatically).
    tf = 128
    for cand in range(f_pad, 127, -128):
        if f_pad % cand == 0 and 2 * cand * cand * csz <= budget // 3:
            tf = cand
            break
    tn = tk = tf

    tm_eff = min(tm, _round_up(batch, 8))              # batch tile (sublane mult.)

    def _vmem_bytes(t):
        # Every BlockSpec is double-buffered by default (including Q / bias).
        return (2 * t * tk * csz          # streamed x tiles
                + 2 * tn * tk * csz       # Q tiles
                + 2 * tn * 4              # bias tiles
                + 2 * t * tn * 4          # output tiles (f32)
                + t * tn * 4)             # f32 accumulator scratch

    while tm_eff > 8 and _vmem_bytes(tm_eff) > budget:
        tm_eff = max(8, tm_eff // 2)

    grid = (pl.cdiv(batch, tm_eff), f_pad // tn, f_pad // tk)

    vmem_limit = int(min(max(_vmem_bytes(tm_eff) + (2 << 20),
                             16 * 1024 * 1024), budget))

    cost = pl.CostEstimate(
        flops=2 * batch * f_pad * f_pad,
        transcendentals=0,
        bytes_accessed=int(x_c.size * csz + q_c.size * csz + b_c.size * 4
                           + batch * f_pad * jnp.dtype(out_dtype).itemsize),
    )

    out = pl.pallas_call(
        ortho_linear_kernel,
        out_shape=jax.ShapeDtypeStruct((batch, f_pad), out_dtype),
        grid=grid,
        in_specs=[
            pl.BlockSpec((tm_eff, tk), lambda i, j, k: (i, k)),   # streamed x
            pl.BlockSpec((tn, tk),     lambda i, j, k: (j, k)),   # Q tile
            pl.BlockSpec((1, tn),      lambda i, j, k: (0, j)),   # bias tile
        ],
        out_specs=pl.BlockSpec((tm_eff, tn), lambda i, j, k: (i, j)),
        scratch_shapes=[pltpu.VMEM((tm_eff, tn), jnp.float32)],
        compiler_params=pltpu.CompilerParams(
            dimension_semantics=("parallel", "parallel", "arbitrary"),
            vmem_limit_bytes=vmem_limit,
        ),
        cost_estimate=cost,
    )(x_c, q_c, b_c)

    return out[:, :feats] if pad_f else out


if __name__ == "__main__":
    features = 32
    batch = 8

    key = jax.random.PRNGKey(0)
    k_x, k_w = jax.random.split(key)

    n_params = features * (features - 1) // 2           # 496

    # reset_parameters(): weight ~ U(-pi/2, pi/2); bias ends up zero
    # (init.uniform_ followed by init.zeros_).
    weight = jax.random.uniform(
        k_w, (n_params,), dtype=jnp.float32,
        minval=-math.pi / 2.0, maxval=math.pi / 2.0)
    bias = jnp.zeros((features,), dtype=jnp.float32)

    x = jax.random.normal(k_x, (batch, features), dtype=jnp.float32)

    # Default (fast) bf16-operand path and an f32 validation path.
    y = jax.block_until_ready(ortho_linear(x, weight, bias))
    y_f32 = jax.block_until_ready(
        ortho_linear(x, weight, bias, compute_dtype=jnp.float32))

    # Reference via the explicit dense basis (validates both the direct
    # skew-symmetric construction and the Pallas matmul path).
    basis = ortho_basis(features)                        # (496, 32, 32)
    A_ref = jnp.einsum("k,kij->ij", weight, basis)
    Q_ref = jax.scipy.linalg.expm(A_ref)
    y_ref = x @ Q_ref.T + bias

    np.testing.assert_allclose(np.asarray(y_f32), np.asarray(y_ref),
                               rtol=1e-4, atol=1e-4)
    np.testing.assert_allclose(np.asarray(y), np.asarray(y_ref),
                               rtol=3e-2, atol=3e-2)

    print("KERNEL_OK")
</pallas_src>

<mosaic_0001>
module attributes {stable_mosaic.version = 11 : i64} {
  func.func @ortho_linear_kernel(%arg0: i32, %arg1: i32, %arg2: i32, %arg3: memref<8x128xbf16, #tpu.memory_space<vmem>>, %arg4: memref<128x128xbf16, #tpu.memory_space<vmem>>, %arg5: memref<1x128xf32, #tpu.memory_space<vmem>>, %arg6: memref<8x128xf32, #tpu.memory_space<vmem>>, %arg7: memref<8x128xf32, #tpu.memory_space<vmem>>) attributes {dimension_semantics = [#tpu.dimension_semantics<parallel>, #tpu.dimension_semantics<parallel>, #tpu.dimension_semantics<arbitrary>], iteration_bounds = array<i64: 1, 1, 1>, scalar_prefetch = 0 : i64, scratch_operands = 1 : i64, tpu.core_type = #tpu.core_type<tc>, window_params = [{transform_indices = @transform_0, window_bounds = array<i64: 8, 128>}, {transform_indices = @transform_1, window_bounds = array<i64: 128, 128>}, {transform_indices = @transform_2, window_bounds = array<i64: 1, 128>}, {transform_indices = @transform_3, window_bounds = array<i64: 8, 128>}]} {
    %c0_i32 = arith.constant 0 : i32
    %0 = arith.cmpi eq, %arg2, %c0_i32 : i32
    %1 = arith.extui %0 : i1 to i32
    %c0_i32_0 = arith.constant 0 : i32
    %2 = arith.cmpi ne, %1, %c0_i32_0 : i32
    scf.if %2 {
      %cst_10 = arith.constant 0.000000e+00 : f32
      %12 = vector.broadcast %cst_10 : f32 to vector<8x128xf32>
      %c0_11 = arith.constant 0 : index
      %c0_12 = arith.constant 0 : index
      %13 = vector.load %arg7[%c0_11, %c0_12] : memref<8x128xf32, #tpu.memory_space<vmem>>, vector<8x128xf32>
      tpu.vector_store %arg7[%c0_11, %c0_12], %12 {strides = array<i32>} : memref<8x128xf32, #tpu.memory_space<vmem>>, vector<8x128xf32>,
    } else {
    }
    %c0 = arith.constant 0 : index
    %c0_1 = arith.constant 0 : index
    %3 = vector.load %arg7[%c0, %c0_1] : memref<8x128xf32, #tpu.memory_space<vmem>>, vector<8x128xf32>
    %c0_2 = arith.constant 0 : index
    %c0_3 = arith.constant 0 : index
    %4 = vector.load %arg3[%c0_2, %c0_3] : memref<8x128xbf16, #tpu.memory_space<vmem>>, vector<8x128xbf16>
    %c0_4 = arith.constant 0 : index
    %c0_5 = arith.constant 0 : index
    %5 = vector.load %arg4[%c0_4, %c0_5] : memref<128x128xbf16, #tpu.memory_space<vmem>>, vector<128x128xbf16>
    %cst = arith.constant dense<0.000000e+00> : vector<8x128xf32>
    %6 = tpu.matmul %4, %5, %cst {dimension_numbers = #tpu.dot_dimension_numbers<[1], [1], [0], [0], [0, 0, 1, 0], [], []>} : vector<8x128xbf16>, vector<128x128xbf16>, vector<8x128xf32> -> vector<8x128xf32>
    %7 = arith.addf %3, %6 : vector<8x128xf32>
    %c0_6 = arith.constant 0 : index
    %c0_7 = arith.constant 0 : index
    %8 = vector.load %arg7[%c0_6, %c0_7] : memref<8x128xf32, #tpu.memory_space<vmem>>, vector<8x128xf32>
    tpu.vector_store %arg7[%c0_6, %c0_7], %7 {strides = array<i32>} : memref<8x128xf32, #tpu.memory_space<vmem>>, vector<8x128xf32>,
    %c0_i32_8 = arith.constant 0 : i32
    %9 = arith.cmpi eq, %arg2, %c0_i32_8 : i32
    %10 = arith.extui %9 : i1 to i32
    %c0_i32_9 = arith.constant 0 : i32
    %11 = arith.cmpi ne, %10, %c0_i32_9 : i32
    scf.if %11 {
      %c0_10 = arith.constant 0 : index
      %c0_11 = arith.constant 0 : index
      %12 = vector.load %arg7[%c0_10, %c0_11] : memref<8x128xf32, #tpu.memory_space<vmem>>, vector<8x128xf32>
      %c0_12 = arith.constant 0 : index
      %c0_13 = arith.constant 0 : index
      %13 = vector.load %arg5[%c0_12, %c0_13] : memref<1x128xf32, #tpu.memory_space<vmem>>, vector<1x128xf32>
      %14 = vector.broadcast %13 : vector<1x128xf32> to vector<8x128xf32>
      %15 = arith.addf %12, %14 : vector<8x128xf32>
      %c0_14 = arith.constant 0 : index
      %c0_15 = arith.constant 0 : index
      %16 = vector.load %arg6[%c0_14, %c0_15] : memref<8x128xf32, #tpu.memory_space<vmem>>, vector<8x128xf32>
      tpu.vector_store %arg6[%c0_14, %c0_15], %15 {strides = array<i32>} : memref<8x128xf32, #tpu.memory_space<vmem>>, vector<8x128xf32>,
    } else {
    }
    return
  }
  func.func @transform_0(%arg0: i32, %arg1: i32, %arg2: i32) -> (i32, i32) {
    %c0_i32 = arith.constant 0 : i32
    return %arg0, %arg2 : i32, i32
  }
  func.func @transform_1(%arg0: i32, %arg1: i32, %arg2: i32) -> (i32, i32) {
    %c0_i32 = arith.constant 0 : i32
    return %arg1, %arg2 : i32, i32
  }
  func.func @transform_2(%arg0: i32, %arg1: i32, %arg2: i32) -> (i32, i32) {
    %c0_i32 = arith.constant 0 : i32
    %c0_i32_0 = arith.constant 0 : i32
    return %c0_i32, %arg1 : i32, i32
  }
  func.func @transform_3(%arg0: i32, %arg1: i32, %arg2: i32) -> (i32, i32) {
    %c0_i32 = arith.constant 0 : i32
    return %arg0, %arg1 : i32, i32
  }
}

</mosaic_0001>

<llo_original>
// kernel: tpu_custom_call.1
$region0: #{tpu_custom_call.1}
  #allocation0 [shape = 'u32[]', space=smem, size = 0x4, offset = 0x4, fixed_abs, tag = 'smem constant byte address 0x4 - core index']
  #allocation1 [shape = 'u32[144,128]{1,0:T(1,128)}', space=vmem, size = 0x12000, scoped, tag = 'internal scratch']
  #allocation2 [shape = 'f32[8,128]{1,0:T(8,128)}', space=vmem, size = 0x1000, scoped, tag = 'scratch operand']
  %s0 = inlined_call_operand.hbm [shape: bf16[8,128], index: 0, kind: input, shape index: {}]
  %s1 = inlined_call_operand.hbm [shape: bf16[128,128], index: 1, kind: input, shape index: {}]
  %s2 = inlined_call_operand.vmem [shape: f32[1,128], index: 2, kind: input, shape index: {}]
  %s3 = inlined_call_operand.hbm [shape: f32[8,128], index: 3, kind: output, shape index: {}]
  %s4 = sld [smem:[#allocation0]]
  $region38: #{tpu_custom_call.1} parent=0
    _
  %s6 = ssub.s32 1, %s4
  %s7 = scalar_select 0, %s6, %s4
  $region1: #{tpu_custom_call.1} parent=0
    #allocation3 [shape = 'u8[2048]{0}', space=vmem, size = 0x800, scoped, tag = 'input window, operand 0, single buffered']
    #allocation4 [shape = 's32[1]{0}', space=sflag, size = 0x4, scoped, tag = 'scoped memory for tpu_custom_call.1']
    #allocation5 [shape = 's32[1]{0}', space=sflag, size = 0x4, scoped, tag = 'scoped memory for tpu_custom_call.1']
    #allocation6 [shape = 'u8[32768]{0}', space=vmem, size = 0x8000, scoped, tag = 'input window, operand 1, single buffered']
    #allocation7 [shape = 's32[1]{0}', space=sflag, size = 0x4, scoped, tag = 'scoped memory for tpu_custom_call.1']
    #allocation8 [shape = 'u8[4096]{0}', space=vmem, size = 0x1000, scoped, tag = 'output window, operand 0, single buffered']
    %8 = vsyncpa [#allocation4], 0
    %9 = vsyncpa [#allocation7], 0
    %10 = vsyncpa [#allocation5], 0
    // Predicated region
    $region2: #{tpu_custom_call.1} parent=1 // pred_check
      _
    $region3: #{tpu_custom_call.1} parent=1 // pred_check_branch
      %12 = sbr.rel (0) target = $region5
    $region4: #{tpu_custom_call.1} parent=1 // pred_region
      %s14 = ssub.s32 64, 64
      %15 = vsyncadd [#allocation4], %s14
      %s17 = sshll.u32 [#allocation3], 4
      %s18 = int_to_ptr.vmem [resolvable:$true] %s17
      %20 = dma.hbm_to_vmem [thread:$0]  %s0, 64, %s18, [#allocation4]
    $region5: #{tpu_custom_call.1} parent=1 // pred_fallthru
      _
    // Predicated region
    $region6: #{tpu_custom_call.1} parent=1 // pred_check
      _
    $region7: #{tpu_custom_call.1} parent=1 // pred_check_branch
      %22 = sbr.rel (0) target = $region9
    $region8: #{tpu_custom_call.1} parent=1 // pred_region
      %s24 = ssub.s32 1024, 1024
      %25 = vsyncadd [#allocation7], %s24
      %s26 = sshll.u32 [#allocation6], 4
      %s27 = int_to_ptr.vmem [resolvable:$true] %s26
      %32 = dma.hbm_to_vmem [thread:$0]  %s1, 1024, %s27, [#allocation7], 64, 64, 4
    $region9: #{tpu_custom_call.1} parent=1 // pred_fallthru
      _
    // Predicated region
    $region10: #{tpu_custom_call.1} parent=1 // pred_check
      _
    $region11: #{tpu_custom_call.1} parent=1 // pred_check_branch
      %34 = sbr.rel (0) target = $region13
    $region12: #{tpu_custom_call.1} parent=1 // pred_region
      _
    $region13: #{tpu_custom_call.1} parent=1 // pred_fallthru
      _
    // Predicated region
    $region14: #{tpu_custom_call.1} parent=1 // pred_check
      _
    $region15: #{tpu_custom_call.1} parent=1 // pred_check_branch
      %36 = sbr.rel (0) target = $region17
    $region16: #{tpu_custom_call.1} parent=1 // pred_region
      %37 = dma.done [#allocation4], 64
    $region17: #{tpu_custom_call.1} parent=1 // pred_fallthru
      _
    // Predicated region
    $region18: #{tpu_custom_call.1} parent=1 // pred_check
      _
    $region19: #{tpu_custom_call.1} parent=1 // pred_check_branch
      %39 = sbr.rel (0) target = $region21
    $region20: #{tpu_custom_call.1} parent=1 // pred_region
      %40 = dma.done [#allocation7], 1024
    $region21: #{tpu_custom_call.1} parent=1 // pred_fallthru
      _
    %p42 = scmp.eq.s32.totalorder 0, 0
    // Predicated region
    $region22: #{tpu_custom_call.1} parent=1 // pred_check
      %p43 = pneg %p42
    $region23: #{tpu_custom_call.1} parent=1 // pred_check_branch
      %45 = sbr.rel (%p43) target = $region25
    $region24: #{tpu_custom_call.1} parent=1 // pred_region
      %46 = vst [vmem:[#allocation2] sm:$0xff] 0.0
    $region25: #{tpu_custom_call.1} parent=1 // pred_fallthru
      _
    %v47 = vld [vmem:[#allocation2] sm:$0xff]
    %v48 = vld [vmem:[#allocation3] sm:$0xf]
    %v49 = vld [vmem:[#allocation6] sm:$0xf]
    %v50 = vld [vmem:[#allocation6 + $0x4] sm:$0xf]
    %v51 = vld [vmem:[#allocation6 + $0x8] sm:$0xf]
    %v52 = vld [vmem:[#allocation6 + $0xc] sm:$0xf]
    %v53 = vld [vmem:[#allocation6 + $0x10] sm:$0xf]
    %v54 = vld [vmem:[#allocation6 + $0x14] sm:$0xf]
    %v55 = vld [vmem:[#allocation6 + $0x18] sm:$0xf]
    %v56 = vld [vmem:[#allocation6 + $0x1c] sm:$0xf]
    %v57 = vld [vmem:[#allocation6 + $0x20] sm:$0xf]
    %v58 = vld [vmem:[#allocation6 + $0x24] sm:$0xf]
    %v59 = vld [vmem:[#allocation6 + $0x28] sm:$0xf]
    %v60 = vld [vmem:[#allocation6 + $0x2c] sm:$0xf]
    %v61 = vld [vmem:[#allocation6 + $0x30] sm:$0xf]
    %v62 = vld [vmem:[#allocation6 + $0x34] sm:$0xf]
    %v63 = vld [vmem:[#allocation6 + $0x38] sm:$0xf]
    %v64 = vld [vmem:[#allocation6 + $0x3c] sm:$0xf]
    %v81 = vunpack.c.l.b16 %v49
    %v82 = vunpack.c.l.b16 %v50
    %v83 = vunpack.c.l.b16 %v51
    %v84 = vunpack.c.l.b16 %v52
    %v85 = vunpack.c.l.b16 %v53
    %v86 = vunpack.c.l.b16 %v54
    %v87 = vunpack.c.l.b16 %v55
    %v88 = vunpack.c.l.b16 %v56
    %v89 = vunpack.c.l.b16 %v57
    %v90 = vunpack.c.l.b16 %v58
    %v91 = vunpack.c.l.b16 %v59
    %v92 = vunpack.c.l.b16 %v60
    %v93 = vunpack.c.l.b16 %v61
    %v94 = vunpack.c.l.b16 %v62
    %v95 = vunpack.c.l.b16 %v63
    %v96 = vunpack.c.l.b16 %v64
    %v97 = vpack.c.b16 %v82, %v81
    %v98 = vpack.c.b16 %v84, %v83
    %v99 = vpack.c.b16 %v86, %v85
    %v100 = vpack.c.b16 %v88, %v87
    %v101 = vpack.c.b16 %v90, %v89
    %v102 = vpack.c.b16 %v92, %v91
    %v103 = vpack.c.b16 %v94, %v93
    %v104 = vpack.c.b16 %v96, %v95
    %113 = vmatprep.subr.bf16.mxu0 0
    %114 = vmatpush1.bf16.xpose.msra.mxu0 %v97
    %115 = vmatprep.subr.bf16.mxu0 0
    %116 = vmatpush1.bf16.xpose.msra.mxu0 %v98
    %117 = vmatprep.subr.bf16.mxu0 0
    %118 = vmatpush1.bf16.xpose.msra.mxu0 %v99
    %119 = vmatprep.subr.bf16.mxu0 0
    %120 = vmatpush1.bf16.xpose.msra.mxu0 %v100
    %121 = vmatprep.subr.bf16.mxu0 0
    %122 = vmatpush1.bf16.xpose.msra.mxu0 %v101
    %123 = vmatprep.subr.bf16.mxu0 0
    %124 = vmatpush1.bf16.xpose.msra.mxu0 %v102
    %125 = vmatprep.subr.bf16.mxu0 0
    %126 = vmatpush1.bf16.xpose.msra.mxu0 %v103
    %127 = vmatprep.subr.bf16.mxu0 0
    %128 = vmatpush1.bf16.xpose.msra.mxu0 %v104
    %129 = vmatprep.subr.bf16.mxu0 0
    %130 = vmatpush1.bf16.xpose.msra.mxu0 0
    %131 = vmatprep.subr.bf16.mxu0 0
    %132 = vmatpush1.bf16.xpose.msra.mxu0 0
    %133 = vmatprep.subr.bf16.mxu0 0
    %134 = vmatpush1.bf16.xpose.msra.mxu0 0
    %135 = vmatprep.subr.bf16.mxu0 0
    %136 = vmatpush1.bf16.xpose.msra.mxu0 0
    %137 = vmatprep.subr.bf16.mxu0 0
    %138 = vmatpush1.bf16.xpose.msra.mxu0 0
    %139 = vmatprep.subr.bf16.mxu0 0
    %140 = vmatpush1.bf16.xpose.msra.mxu0 0
    %141 = vmatprep.subr.bf16.mxu0 0
    %142 = vmatpush1.bf16.xpose.msra.mxu0 0
    %143 = vmatprep.subr.bf16.mxu0 0
    %144 = vmatpush1.bf16.xpose.msra.mxu0 0
    %145 = vmatprep.mubr.bf16.mxu0 0
    %146 = vmatmul.mubr.bf16.gmra.mrb[0].mxu0 %v48
    %v147 = vpop.f32.mrb[0].mxu0
    %v148 = vadd.f32 0.0, %v147
    %v149 = vpop.f32.mrb[0].mxu0
    %v150 = vpop.f32.mrb[0].mxu0
    %v151 = vpop.f32.mrb[0].mxu0
    %152 = vdwg.mxu0
    %v153 = vadd.f32 %v47, %v148
    %154 = vst [vmem:[#allocation2] sm:$0xff] %v153
    // Predicated region
    $region26: #{tpu_custom_call.1} parent=1 // pred_check
      %p155 = pneg %p42
    $region27: #{tpu_custom_call.1} parent=1 // pred_check_branch
      %157 = sbr.rel (%p155) target = $region29
    $region28: #{tpu_custom_call.1} parent=1 // pred_region
      %v158 = vld [vmem:[#allocation2] sm:$0xff]
      %v159 = vld [vmem:[%s2] sm:$0x1]
      %v161 = vlaneseq
      %v162 = vshrl.u32 %v161, 7
      %v163 = vsub.s32 0, %v162
      %v164 = vrot.slane %v159, %v163
      %v166 = vadd.f32 %v158, %v164
      %167 = vst [vmem:[#allocation8] sm:$0xff] %v166
    $region29: #{tpu_custom_call.1} parent=1 // pred_fallthru
      _
    // Predicated region
    $region30: #{tpu_custom_call.1} parent=1 // pred_check
      _
    $region31: #{tpu_custom_call.1} parent=1 // pred_check_branch
      %169 = sbr.rel (0) target = $region33
    $region32: #{tpu_custom_call.1} parent=1 // pred_region
      %s171 = ssub.s32 128, 128
      %172 = vsyncadd [#allocation5], %s171
      %s174 = sshll.u32 [#allocation8], 4
      %s175 = int_to_ptr.vmem [resolvable:$true] %s174
      %177 = dma.vmem_to_hbm [thread:$0]  %s175, 128, %s3, [#allocation5]
    $region33: #{tpu_custom_call.1} parent=1 // pred_fallthru
      _
    // Predicated region
    $region34: #{tpu_custom_call.1} parent=1 // pred_check
      _
    $region35: #{tpu_custom_call.1} parent=1 // pred_check_branch
      %179 = sbr.rel (0) target = $region37
    $region36: #{tpu_custom_call.1} parent=1 // pred_region
      %180 = dma.done [#allocation5], 128
    $region37: #{tpu_custom_call.1} parent=1 // pred_fallthru
      _
    %181 = vsyncpa [#allocation4], 1
    %182 = vsyncpa [#allocation7], 1
    %183 = vsyncpa [#allocation5], 1

</llo_original>
